<compile_context>
chip_gen: v7x
topology: tpu7x:2x2x1
jax: 0.10.0
libtpu: 0.0.40
codegen_flags: <defaults>
</compile_context>

<pallas_src>
import math
import functools

import jax
import jax.numpy as jnp
from jax.experimental import pallas as pl
from jax.experimental.pallas import tpu as pltpu


def _round_up(x, m):
    return (x + m - 1) // m * m


# ----------------------------- Pallas kernel --------------------------------

def _fused_mlp_kernel(x_ref, w_ref, b_ref, out_ref, *,
                      layer_meta, n_nets, out_dim, activation):
    """Whole depth-L multi-net MLP, fully VMEM/vreg resident.

    x_ref   : (B_pad, in_dim)            shared input
    w_ref   : (sum_rows_pad, lane_pad)   all packed weights, row-stacked slab
    b_ref   : (n_layers, lane_pad)       packed biases, one row per layer
    out_ref : (n_nets, B_pad, out_dim)   final output (un-packed in-kernel)
    layer_meta : static tuple of (row_off, in_flat, out_flat) per layer
    """
    act = jnp.tanh if activation == "tanh" else jnp.sin
    n_layers = len(layer_meta)

    h = x_ref[...]
    for i, (row_off, in_flat, out_flat) in enumerate(layer_meta):   # static unroll
        w = w_ref[row_off:row_off + in_flat, :out_flat]   # static sub-view of the slab
        b = b_ref[i:i + 1, :out_flat]
        h = jnp.dot(h, w, preferred_element_type=jnp.float32) + b
        if i != n_layers - 1:
            h = act(h)

    # Un-pack lanes -> (n_nets, B, out) directly in-kernel: no wrapper transpose,
    # no extra XLA dispatch / HBM round-trip of the output.
    for n in range(n_nets):
        out_ref[n, :, :] = h[:, n * out_dim:(n + 1) * out_dim].astype(out_ref.dtype)


# --------------------------- Param init & packing ----------------------------

def init_solution_mlp_mult_params(key, layers, n_nets):
    """Deterministic init matching LinearMult.init_weights bounds.

    gain = sqrt(2/(1+5)); bound_w = sqrt(3)*gain/sqrt(fan_in) = 1/sqrt(fan_in)
    bound_b = 1/sqrt(fan_in).  PyTorch layout: w (n_nets, out, in), b (n_nets, 1, out).
    """
    params = []
    for i in range(len(layers) - 1):
        in_dim, out_dim = layers[i], layers[i + 1]
        key, kw, kb = jax.random.split(key, 3)
        bound = 1.0 / math.sqrt(in_dim)
        w = jax.random.uniform(kw, (n_nets, out_dim, in_dim), jnp.float32, -bound, bound)
        b = jax.random.uniform(kb, (n_nets, 1, out_dim), jnp.float32, -bound, bound)
        params.append((w, b))
    return params


def _block_diag(mats):
    n = len(mats)
    r, c = mats[0].shape
    rows = []
    for i, m in enumerate(mats):
        row = [m if j == i else jnp.zeros((r, c), m.dtype) for j in range(n)]
        rows.append(jnp.concatenate(row, axis=1))
    return jnp.concatenate(rows, axis=0)


def pack_solution_mlp_mult_params(params):
    """One-time packing of PyTorch-layout params into the fused-kernel slabs.

    Returns (w_slab, b_slab, layer_meta):
      w_slab : (sum_i round_up(in_flat_i, 8), lane_pad) f32 -- all layers stacked
               row-wise (layer 0 = shared-input concat, layers>0 = block-diagonal),
               zero-padded so every layer starts on a sublane-aligned row.
      b_slab : (n_layers, lane_pad) f32 -- bias of layer i in row i.
      layer_meta : static tuple of (row_off, in_flat, out_flat).
    """
    packed_w, packed_b = [], []
    for i, (w, b) in enumerate(params):
        n_nets, out_dim, in_dim = w.shape
        wt = jnp.transpose(w, (0, 2, 1))                       # (n, in, out)
        if i == 0:
            W = jnp.transpose(wt, (1, 0, 2)).reshape(in_dim, n_nets * out_dim)
        else:
            W = _block_diag([wt[n] for n in range(n_nets)])
        packed_w.append(W)
        packed_b.append(b.reshape(1, n_nets * out_dim))

    lane_pad = _round_up(max(W.shape[1] for W in packed_w), 128)

    w_rows, layer_meta, row_off = [], [], 0
    for W in packed_w:
        in_flat, out_flat = W.shape
        rows_pad = _round_up(in_flat, 8)
        Wp = jnp.zeros((rows_pad, lane_pad), jnp.float32).at[:in_flat, :out_flat].set(W)
        w_rows.append(Wp)
        layer_meta.append((row_off, in_flat, out_flat))
        row_off += rows_pad
    w_slab = jnp.concatenate(w_rows, axis=0)

    b_rows = [jnp.zeros((1, lane_pad), jnp.float32).at[:, :Bp.shape[1]].set(Bp)
              for Bp in packed_b]
    b_slab = jnp.concatenate(b_rows, axis=0)

    return w_slab, b_slab, tuple(layer_meta)


# ----------------------------- Model wrapper ---------------------------------

def solution_mlp_mult_forward(packed, t, n_nets, n_states, activation="tanh"):
    """Forward pass of SolutionMLPMult (mapping=None) as a single fused kernel.

    t: (B, in_dim) shared input.  Returns (n_nets, B, n_states).
    """
    if activation not in ("tanh", "sin"):
        raise ValueError(f"Unknown non-linearity {activation}")
    assert t.ndim == 2, "fused kernel expects the shared 2-D input t (batch, in_dim)"
    # TODO(synk): per-net 3-D inputs (n_nets, B, in) would need layer 0 packed
    #             block-diagonally too; SolutionMLPMult feeds a shared t.
    # TODO(synk): `mapping` callable (None in this config) would be applied to t here.

    w_slab, b_slab, layer_meta = packed
    n_layers = len(layer_meta)

    B = t.shape[0]
    B_pad = _round_up(B, 8)                       # keep vregs row-dense
    x = t if B_pad == B else jnp.pad(t, ((0, B_pad - B), (0, 0)))

    # Cost estimate counts only non-zero blocks of the block-diagonal layers.
    flops = 0
    for i, (_, in_flat, out_flat) in enumerate(layer_meta):
        nz = in_flat * out_flat if i == 0 else (in_flat * out_flat) // n_nets
        flops += 2 * B_pad * nz
    transcendentals = B_pad * sum(m[2] for m in layer_meta[:-1])
    bytes_accessed = 4 * (x.size + w_slab.size + b_slab.size + n_nets * B_pad * n_states)

    vmem_raw = bytes_accessed
    vmem_limit = int(min(max(8 * vmem_raw + (2 << 20), 8 << 20), 64 << 20))

    kernel = functools.partial(
        _fused_mlp_kernel,
        layer_meta=layer_meta, n_nets=n_nets, out_dim=n_states, activation=activation,
    )

    y = pl.pallas_call(
        kernel,
        out_shape=jax.ShapeDtypeStruct((n_nets, B_pad, n_states), jnp.float32),
        in_specs=[pl.BlockSpec(memory_space=pltpu.MemorySpace.VMEM)] * 3,
        out_specs=pl.BlockSpec(memory_space=pltpu.MemorySpace.VMEM),
        compiler_params=pltpu.CompilerParams(vmem_limit_bytes=vmem_limit),
        cost_estimate=pl.CostEstimate(
            flops=flops,
            transcendentals=transcendentals,
            bytes_accessed=bytes_accessed,
        ),
    )(x, w_slab, b_slab)

    return y if B_pad == B else y[:, :B, :]


def solution_mlp_mult_reference(params, t, activation="tanh"):
    """Pure-JAX reference (original PyTorch-layout params) for verification."""
    act_fn = jnp.tanh if activation == "tanh" else jnp.sin
    n = len(params)
    t1 = t
    for i, (w, b) in enumerate(params):
        if t1.ndim < 3:
            y = jnp.einsum("bi,noi->nbo", t1, w) + b
        else:
            y = jnp.einsum("nbi,noi->nbo", t1, w) + b
        t1 = act_fn(y) if i != n - 1 else y
    return t1


# --------------------------------- main --------------------------------------

if __name__ == "__main__":
    layers = [4, 32, 32, 2]   # in_dim=4, two hidden of 32, n_states=2
    n_nets = 3
    batch = 8
    activation = "tanh"

    key = jax.random.PRNGKey(0)
    key, kp, kx = jax.random.split(key, 3)
    params = init_solution_mlp_mult_params(kp, layers, n_nets)

    # One-time packing into two lane-aligned slabs, off the per-forward path.
    packed = pack_solution_mlp_mult_params(params)
    packed = (jax.block_until_ready(packed[0]), jax.block_until_ready(packed[1]), packed[2])

    t = jax.random.normal(kx, (batch, layers[0]), jnp.float32)

    out = solution_mlp_mult_forward(packed, t, n_nets, layers[-1], activation=activation)
    out = jax.block_until_ready(out)

    ref = solution_mlp_mult_reference(params, t, activation=activation)
    assert out.shape == (n_nets, batch, layers[-1]), out.shape
    err = float(jnp.max(jnp.abs(out - ref)))
    assert jnp.allclose(out, ref, atol=1e-5, rtol=1e-5), err

    print("KERNEL_OK")
</pallas_src>

<mosaic_0001>
module attributes {stable_mosaic.version = 11 : i64} {
  func.func @_fused_mlp_kernel(%arg0: memref<8x4xf32, #tpu.memory_space<vmem>>, %arg1: memref<200x128xf32, #tpu.memory_space<vmem>>, %arg2: memref<3x128xf32, #tpu.memory_space<vmem>>, %arg3: memref<3x8x2xf32, #tpu.memory_space<vmem>>) attributes {dimension_semantics = [], scalar_prefetch = 0 : i64, scratch_operands = 0 : i64, tpu.core_type = #tpu.core_type<tc>} {
    %c0 = arith.constant 0 : index
    %c0_0 = arith.constant 0 : index
    %0 = vector.load %arg0[%c0, %c0_0] : memref<8x4xf32, #tpu.memory_space<vmem>>, vector<8x4xf32>
    %c0_1 = arith.constant 0 : index
    %c0_2 = arith.constant 0 : index
    %1 = vector.load %arg1[%c0_1, %c0_2] : memref<200x128xf32, #tpu.memory_space<vmem>>, vector<4x96xf32>
    %c0_3 = arith.constant 0 : index
    %c0_4 = arith.constant 0 : index
    %2 = vector.load %arg2[%c0_3, %c0_4] : memref<3x128xf32, #tpu.memory_space<vmem>>, vector<1x96xf32>
    %cst = arith.constant dense<0.000000e+00> : vector<8x96xf32>
    %3 = tpu.matmul %0, %1, %cst {dimension_numbers = #tpu.dot_dimension_numbers<[1], [0], [0], [1], [0, 0, 1, 1], [], []>} : vector<8x4xf32>, vector<4x96xf32>, vector<8x96xf32> -> vector<8x96xf32>
    %4 = vector.broadcast %2 : vector<1x96xf32> to vector<8x96xf32>
    %5 = arith.addf %3, %4 : vector<8x96xf32>
    %6 = math.tanh %5 : vector<8x96xf32>
    %c8 = arith.constant 8 : index
    %c0_5 = arith.constant 0 : index
    %7 = vector.load %arg1[%c8, %c0_5] : memref<200x128xf32, #tpu.memory_space<vmem>>, vector<96x96xf32>
    %c1 = arith.constant 1 : index
    %c0_6 = arith.constant 0 : index
    %8 = vector.load %arg2[%c1, %c0_6] : memref<3x128xf32, #tpu.memory_space<vmem>>, vector<1x96xf32>
    %cst_7 = arith.constant dense<0.000000e+00> : vector<8x96xf32>
    %9 = tpu.matmul %6, %7, %cst_7 {dimension_numbers = #tpu.dot_dimension_numbers<[1], [0], [0], [1], [0, 0, 1, 1], [], []>} : vector<8x96xf32>, vector<96x96xf32>, vector<8x96xf32> -> vector<8x96xf32>
    %10 = vector.broadcast %8 : vector<1x96xf32> to vector<8x96xf32>
    %11 = arith.addf %9, %10 : vector<8x96xf32>
    %12 = math.tanh %11 : vector<8x96xf32>
    %c104 = arith.constant 104 : index
    %c0_8 = arith.constant 0 : index
    %13 = vector.load %arg1[%c104, %c0_8] : memref<200x128xf32, #tpu.memory_space<vmem>>, vector<96x6xf32>
    %c2 = arith.constant 2 : index
    %c0_9 = arith.constant 0 : index
    %14 = vector.load %arg2[%c2, %c0_9] : memref<3x128xf32, #tpu.memory_space<vmem>>, vector<1x6xf32>
    %cst_10 = arith.constant dense<0.000000e+00> : vector<8x6xf32>
    %15 = tpu.matmul %12, %13, %cst_10 {dimension_numbers = #tpu.dot_dimension_numbers<[1], [0], [0], [1], [0, 0, 1, 1], [], []>} : vector<8x96xf32>, vector<96x6xf32>, vector<8x6xf32> -> vector<8x6xf32>
    %16 = vector.broadcast %14 : vector<1x6xf32> to vector<8x6xf32>
    %17 = arith.addf %15, %16 : vector<8x6xf32>
    %18 = vector.extract_strided_slice %17 {offsets = [0, 0], sizes = [8, 2], strides = [1, 1]} : vector<8x6xf32> to vector<8x2xf32>
    %c0_11 = arith.constant 0 : index
    %c0_12 = arith.constant 0 : index
    %c0_13 = arith.constant 0 : index
    %19 = vector.load %arg3[%c0_11, %c0_12, %c0_13] : memref<3x8x2xf32, #tpu.memory_space<vmem>>, vector<1x8x2xf32>
    %20 = vector.shape_cast %19 : vector<1x8x2xf32> to vector<8x2xf32>
    %21 = vector.shape_cast %18 : vector<8x2xf32> to vector<1x8x2xf32>
    tpu.vector_store %arg3[%c0_11, %c0_12, %c0_13], %21 {strides = array<i32>} : memref<3x8x2xf32, #tpu.memory_space<vmem>>, vector<1x8x2xf32>,
    %22 = vector.extract_strided_slice %17 {offsets = [0, 2], sizes = [8, 2], strides = [1, 1]} : vector<8x6xf32> to vector<8x2xf32>
    %c1_14 = arith.constant 1 : index
    %c0_15 = arith.constant 0 : index
    %c0_16 = arith.constant 0 : index
    %23 = vector.load %arg3[%c1_14, %c0_15, %c0_16] : memref<3x8x2xf32, #tpu.memory_space<vmem>>, vector<1x8x2xf32>
    %24 = vector.shape_cast %23 : vector<1x8x2xf32> to vector<8x2xf32>
    %25 = vector.shape_cast %22 : vector<8x2xf32> to vector<1x8x2xf32>
    tpu.vector_store %arg3[%c1_14, %c0_15, %c0_16], %25 {strides = array<i32>} : memref<3x8x2xf32, #tpu.memory_space<vmem>>, vector<1x8x2xf32>,
    %26 = vector.extract_strided_slice %17 {offsets = [0, 4], sizes = [8, 2], strides = [1, 1]} : vector<8x6xf32> to vector<8x2xf32>
    %c2_17 = arith.constant 2 : index
    %c0_18 = arith.constant 0 : index
    %c0_19 = arith.constant 0 : index
    %27 = vector.load %arg3[%c2_17, %c0_18, %c0_19] : memref<3x8x2xf32, #tpu.memory_space<vmem>>, vector<1x8x2xf32>
    %28 = vector.shape_cast %27 : vector<1x8x2xf32> to vector<8x2xf32>
    %29 = vector.shape_cast %26 : vector<8x2xf32> to vector<1x8x2xf32>
    tpu.vector_store %arg3[%c2_17, %c0_18, %c0_19], %29 {strides = array<i32>} : memref<3x8x2xf32, #tpu.memory_space<vmem>>, vector<1x8x2xf32>,
    return
  }
}

</mosaic_0001>

<llo_original>
// kernel: tpu_custom_call.1
$region0: #{tpu_custom_call.1}
  #allocation0 [shape = 'u32[]', space=smem, size = 0x4, offset = 0x4, fixed_abs, tag = 'smem constant byte address 0x4 - core index']
  #allocation1 [shape = 'u32[144,128]{1,0:T(1,128)}', space=vmem, size = 0x12000, scoped, tag = 'internal scratch']
  %s0 = inlined_call_operand.vmem [shape: f32[8,4], index: 0, kind: input, shape index: {}]
  %s1 = inlined_call_operand.hbm [shape: f32[200,128], index: 1, kind: input, shape index: {}]
  %s2 = inlined_call_operand.vmem [shape: f32[3,128], index: 2, kind: input, shape index: {}]
  %s3 = inlined_call_operand.vmem [shape: f32[3,8,2], index: 3, kind: output, shape index: {}]
  %s4 = sld [smem:[#allocation0]]
  $region26: #{tpu_custom_call.1} parent=0
    _
  %s6 = ssub.s32 1, %s4
  %s7 = scalar_select 0, %s6, %s4
  $region1: #{tpu_custom_call.1} parent=0
    #allocation2 [shape = 'u8[102400]{0}', space=vmem, size = 0x19000, scoped, tag = 'input window, operand 1, single buffered']
    #allocation3 [shape = 's32[1]{0}', space=sflag, size = 0x4, scoped, tag = 'scoped memory for tpu_custom_call.1']
    %8 = vsyncpa [#allocation3], 0
    // Predicated region
    $region2: #{tpu_custom_call.1} parent=1 // pred_check
      _
    $region3: #{tpu_custom_call.1} parent=1 // pred_check_branch
      %10 = sbr.rel (0) target = $region5
    $region4: #{tpu_custom_call.1} parent=1 // pred_region
      _
    $region5: #{tpu_custom_call.1} parent=1 // pred_fallthru
      _
    // Predicated region
    $region6: #{tpu_custom_call.1} parent=1 // pred_check
      _
    $region7: #{tpu_custom_call.1} parent=1 // pred_check_branch
      %12 = sbr.rel (0) target = $region9
    $region8: #{tpu_custom_call.1} parent=1 // pred_region
      %s14 = ssub.s32 3200, 3200
      %15 = vsyncadd [#allocation3], %s14
      %s16 = sshll.u32 [#allocation2], 4
      %s17 = int_to_ptr.vmem [resolvable:$true] %s16
      %22 = dma.hbm_to_vmem [thread:$0]  %s1, 3200, %s17, [#allocation3], 128, 128, 8
    $region9: #{tpu_custom_call.1} parent=1 // pred_fallthru
      _
    // Predicated region
    $region10: #{tpu_custom_call.1} parent=1 // pred_check
      _
    $region11: #{tpu_custom_call.1} parent=1 // pred_check_branch
      %24 = sbr.rel (0) target = $region13
    $region12: #{tpu_custom_call.1} parent=1 // pred_region
      _
    $region13: #{tpu_custom_call.1} parent=1 // pred_fallthru
      _
    // Predicated region
    $region14: #{tpu_custom_call.1} parent=1 // pred_check
      _
    $region15: #{tpu_custom_call.1} parent=1 // pred_check_branch
      %26 = sbr.rel (0) target = $region17
    $region16: #{tpu_custom_call.1} parent=1 // pred_region
      %27 = dma.done [#allocation3], 3200
    $region17: #{tpu_custom_call.1} parent=1 // pred_fallthru
      _
    %v28 = vld [vmem:[%s0] sm:$0xff]
    %v29 = vld [vmem:[#allocation2] sm:$0xf]
    %v30 = vld [vmem:[%s2] sm:$0x1]
    %v31 = vlaneseq
    %v32 = vshrl.u32 %v31, 7
    %v33 = vsub.s32 0, %v32
    %v34 = vrot.slane %v30, %v33
    %vm35 = vcmask 31744
    %v37 = vsel %vm35, %v28, 0
    %vm39 = vcmask 1043456
    %v41 = vsel %vm39, %v29, 0
    %43 = vmatprep.subr.mxu0 0.0
    %44 = vmatpush1.msra.mxu0 %v41
    %45 = vmatprep.subr.mxu0 0.0
    %46 = vmatpush1.msra.mxu0 0.0
    %47 = vmatprep.subr.mxu0 0.0
    %48 = vmatpush1.msra.mxu0 0.0
    %49 = vmatprep.subr.mxu0 0.0
    %50 = vmatpush1.msra.mxu0 0.0
    %51 = vmatprep.subr.mxu0 0.0
    %52 = vmatpush1.msra.mxu0 0.0
    %53 = vmatprep.subr.mxu0 0.0
    %54 = vmatpush1.msra.mxu0 0.0
    %55 = vmatprep.subr.mxu0 0.0
    %56 = vmatpush1.msra.mxu0 0.0
    %57 = vmatprep.subr.mxu0 0.0
    %58 = vmatpush1.msra.mxu0 0.0
    %59 = vmatprep.subr.mxu0 0.0
    %60 = vmatpush1.msra.mxu0 0.0
    %61 = vmatprep.subr.mxu0 0.0
    %62 = vmatpush1.msra.mxu0 0.0
    %63 = vmatprep.subr.mxu0 0.0
    %64 = vmatpush1.msra.mxu0 0.0
    %65 = vmatprep.subr.mxu0 0.0
    %66 = vmatpush1.msra.mxu0 0.0
    %67 = vmatprep.subr.mxu0 0.0
    %68 = vmatpush1.msra.mxu0 0.0
    %69 = vmatprep.subr.mxu0 0.0
    %70 = vmatpush1.msra.mxu0 0.0
    %71 = vmatprep.subr.mxu0 0.0
    %72 = vmatpush1.msra.mxu0 0.0
    %73 = vmatprep.subr.mxu0 0.0
    %74 = vmatpush1.msra.mxu0 0.0
    %75 = vmatprep.subr.mxu0 0.0
    %76 = vmatpush1.msra.mxu0 0.0
    %77 = vmatprep.subr.mxu0 0.0
    %78 = vmatpush1.msra.mxu0 0.0
    %79 = vmatprep.subr.mxu0 0.0
    %80 = vmatpush1.msra.mxu0 0.0
    %81 = vmatprep.subr.mxu0 0.0
    %82 = vmatpush1.msra.mxu0 0.0
    %83 = vmatprep.subr.mxu0 0.0
    %84 = vmatpush1.msra.mxu0 0.0
    %85 = vmatprep.subr.mxu0 0.0
    %86 = vmatpush1.msra.mxu0 0.0
    %87 = vmatprep.subr.mxu0 0.0
    %88 = vmatpush1.msra.mxu0 0.0
    %89 = vmatprep.subr.mxu0 0.0
    %90 = vmatpush1.msra.mxu0 0.0
    %91 = vmatprep.subr.mxu0 0.0
    %92 = vmatpush1.msra.mxu0 0.0
    %93 = vmatprep.subr.mxu0 0.0
    %94 = vmatpush1.msra.mxu0 0.0
    %95 = vmatprep.subr.mxu0 0.0
    %96 = vmatpush1.msra.mxu0 0.0
    %97 = vmatprep.subr.mxu0 0.0
    %98 = vmatpush1.msra.mxu0 0.0
    %99 = vmatprep.subr.mxu0 0.0
    %100 = vmatpush1.msra.mxu0 0.0
    %101 = vmatprep.subr.mxu0 0.0
    %102 = vmatpush1.msra.mxu0 0.0
    %103 = vmatprep.subr.mxu0 0.0
    %104 = vmatpush1.msra.mxu0 0.0
    %105 = vmatprep.subr.mxu0 0.0
    %106 = vmatpush1.msra.mxu0 0.0
    %107 = vmatprep.mubr.f32.mxu0 0.0
    %108 = vmatmul.mubr.f32.gmra.mrb[0].mxu0 %v37
    %v109 = vpop.f32.mrb[0].mxu0
    %v110 = vadd.f32 %v34, %v109
    %v111 = vpop.f32.mrb[0].mxu0
    %112 = vdwg.mxu0
    %v113 = vtanh.pop %v110
    %v114 = vld [vmem:[#allocation2 + $0x8] sm:$0xff]
    %v115 = vld [vmem:[#allocation2 + $0x10] sm:$0xff]
    %v116 = vld [vmem:[#allocation2 + $0x18] sm:$0xff]
    %v117 = vld [vmem:[#allocation2 + $0x20] sm:$0xff]
    %v118 = vld [vmem:[#allocation2 + $0x28] sm:$0xff]
    %v119 = vld [vmem:[#allocation2 + $0x30] sm:$0xff]
    %v120 = vld [vmem:[#allocation2 + $0x38] sm:$0xff]
    %v121 = vld [vmem:[#allocation2 + $0x40] sm:$0xff]
    %v122 = vld [vmem:[#allocation2 + $0x48] sm:$0xff]
    %v123 = vld [vmem:[#allocation2 + $0x50] sm:$0xff]
    %v124 = vld [vmem:[#allocation2 + $0x58] sm:$0xff]
    %v125 = vld [vmem:[#allocation2 + $0x60] sm:$0xff]
    %v126 = vld [vmem:[%s2 + $0x1] sm:$0x1]
    %v127 = vlaneseq
    %v128 = vshrl.u32 %v127, 7
    %v129 = vsub.s32 0, %v128
    %v130 = vrot.slane %v126, %v129
    %vm131 = vcmask 785408
    %v133 = vsel %vm131, %v113, 0
    %135 = vmatprep.subr.mxu0 0.0
    %136 = vmatpush1.msra.mxu0 %v114
    %137 = vmatprep.subr.mxu0 0.0
    %138 = vmatpush1.msra.mxu0 %v115
    %139 = vmatprep.subr.mxu0 0.0
    %140 = vmatpush1.msra.mxu0 %v116
    %141 = vmatprep.subr.mxu0 0.0
    %142 = vmatpush1.msra.mxu0 %v117
    %143 = vmatprep.subr.mxu0 0.0
    %144 = vmatpush1.msra.mxu0 %v118
    %145 = vmatprep.subr.mxu0 0.0
    %146 = vmatpush1.msra.mxu0 %v119
    %147 = vmatprep.subr.mxu0 0.0
    %148 = vmatpush1.msra.mxu0 %v120
    %149 = vmatprep.subr.mxu0 0.0
    %150 = vmatpush1.msra.mxu0 %v121
    %151 = vmatprep.subr.mxu0 0.0
    %152 = vmatpush1.msra.mxu0 %v122
    %153 = vmatprep.subr.mxu0 0.0
    %154 = vmatpush1.msra.mxu0 %v123
    %155 = vmatprep.subr.mxu0 0.0
    %156 = vmatpush1.msra.mxu0 %v124
    %157 = vmatprep.subr.mxu0 0.0
    %158 = vmatpush1.msra.mxu0 %v125
    %159 = vmatprep.subr.mxu0 0.0
    %160 = vmatpush1.msra.mxu0 0.0
    %161 = vmatprep.subr.mxu0 0.0
    %162 = vmatpush1.msra.mxu0 0.0
    %163 = vmatprep.subr.mxu0 0.0
    %164 = vmatpush1.msra.mxu0 0.0
    %165 = vmatprep.subr.mxu0 0.0
    %166 = vmatpush1.msra.mxu0 0.0
    %167 = vmatprep.subr.mxu0 0.0
    %168 = vmatpush1.msra.mxu0 0.0
    %169 = vmatprep.subr.mxu0 0.0
    %170 = vmatpush1.msra.mxu0 0.0
    %171 = vmatprep.subr.mxu0 0.0
    %172 = vmatpush1.msra.mxu0 0.0
    %173 = vmatprep.subr.mxu0 0.0
    %174 = vmatpush1.msra.mxu0 0.0
    %175 = vmatprep.subr.mxu0 0.0
    %176 = vmatpush1.msra.mxu0 0.0
    %177 = vmatprep.subr.mxu0 0.0
    %178 = vmatpush1.msra.mxu0 0.0
    %179 = vmatprep.subr.mxu0 0.0
    %180 = vmatpush1.msra.mxu0 0.0
    %181 = vmatprep.subr.mxu0 0.0
    %182 = vmatpush1.msra.mxu0 0.0
    %183 = vmatprep.subr.mxu0 0.0
    %184 = vmatpush1.msra.mxu0 0.0
    %185 = vmatprep.subr.mxu0 0.0
    %186 = vmatpush1.msra.mxu0 0.0
    %187 = vmatprep.subr.mxu0 0.0
    %188 = vmatpush1.msra.mxu0 0.0
    %189 = vmatprep.subr.mxu0 0.0
    %190 = vmatpush1.msra.mxu0 0.0
    %191 = vmatprep.subr.mxu0 0.0
    %192 = vmatpush1.msra.mxu0 0.0
    %193 = vmatprep.subr.mxu0 0.0
    %194 = vmatpush1.msra.mxu0 0.0
    %195 = vmatprep.subr.mxu0 0.0
    %196 = vmatpush1.msra.mxu0 0.0
    %197 = vmatprep.subr.mxu0 0.0
    %198 = vmatpush1.msra.mxu0 0.0
    %199 = vmatprep.mubr.f32.mxu0 0.0
    %200 = vmatmul.mubr.f32.gmra.mrb[0].mxu0 %v133
    %v201 = vpop.f32.mrb[0].mxu0
    %v202 = vadd.f32 %v130, %v201
    %v203 = vpop.f32.mrb[0].mxu0
    %204 = vdwg.mxu0
    %v205 = vtanh.pop %v202
    %v206 = vld [vmem:[#allocation2 + $0x68] sm:$0xff]
    %v207 = vld [vmem:[#allocation2 + $0x70] sm:$0xff]
    %v208 = vld [vmem:[#allocation2 + $0x78] sm:$0xff]
    %v209 = vld [vmem:[#allocation2 + $0x80] sm:$0xff]
    %v210 = vld [vmem:[#allocation2 + $0x88] sm:$0xff]
    %v211 = vld [vmem:[#allocation2 + $0x90] sm:$0xff]
    %v212 = vld [vmem:[#allocation2 + $0x98] sm:$0xff]
    %v213 = vld [vmem:[#allocation2 + $0xa0] sm:$0xff]
    %v214 = vld [vmem:[#allocation2 + $0xa8] sm:$0xff]
    %v215 = vld [vmem:[#allocation2 + $0xb0] sm:$0xff]
    %v216 = vld [vmem:[#allocation2 + $0xb8] sm:$0xff]
    %v217 = vld [vmem:[#allocation2 + $0xc0] sm:$0xff]
    %v218 = vld [vmem:[%s2 + $0x2] sm:$0x1]
    %v219 = vlaneseq
    %v220 = vshrl.u32 %v219, 7
    %v221 = vsub.s32 0, %v220
    %v222 = vrot.slane %v218, %v221
    %v224 = vsel %vm131, %v205, 0
    %226 = vmatprep.subr.mxu0 0.0
    %227 = vmatpush1.msra.mxu0 %v206
    %228 = vmatprep.subr.mxu0 0.0
    %229 = vmatpush1.msra.mxu0 %v207
    %230 = vmatprep.subr.mxu0 0.0
    %231 = vmatpush1.msra.mxu0 %v208
    %232 = vmatprep.subr.mxu0 0.0
    %233 = vmatpush1.msra.mxu0 %v209
    %234 = vmatprep.subr.mxu0 0.0
    %235 = vmatpush1.msra.mxu0 %v210
    %236 = vmatprep.subr.mxu0 0.0
    %237 = vmatpush1.msra.mxu0 %v211
    %238 = vmatprep.subr.mxu0 0.0
    %239 = vmatpush1.msra.mxu0 %v212
    %240 = vmatprep.subr.mxu0 0.0
    %241 = vmatpush1.msra.mxu0 %v213
    %242 = vmatprep.subr.mxu0 0.0
    %243 = vmatpush1.msra.mxu0 %v214
    %244 = vmatprep.subr.mxu0 0.0
    %245 = vmatpush1.msra.mxu0 %v215
    %246 = vmatprep.subr.mxu0 0.0
    %247 = vmatpush1.msra.mxu0 %v216
    %248 = vmatprep.subr.mxu0 0.0
    %249 = vmatpush1.msra.mxu0 %v217
    %250 = vmatprep.subr.mxu0 0.0
    %251 = vmatpush1.msra.mxu0 0.0
    %252 = vmatprep.subr.mxu0 0.0
    %253 = vmatpush1.msra.mxu0 0.0
    %254 = vmatprep.subr.mxu0 0.0
    %255 = vmatpush1.msra.mxu0 0.0
    %256 = vmatprep.subr.mxu0 0.0
    %257 = vmatpush1.msra.mxu0 0.0
    %258 = vmatprep.subr.mxu0 0.0
    %259 = vmatpush1.msra.mxu0 0.0
    %260 = vmatprep.subr.mxu0 0.0
    %261 = vmatpush1.msra.mxu0 0.0
    %262 = vmatprep.subr.mxu0 0.0
    %263 = vmatpush1.msra.mxu0 0.0
    %264 = vmatprep.subr.mxu0 0.0
    %265 = vmatpush1.msra.mxu0 0.0
    %266 = vmatprep.subr.mxu0 0.0
    %267 = vmatpush1.msra.mxu0 0.0
    %268 = vmatprep.subr.mxu0 0.0
    %269 = vmatpush1.msra.mxu0 0.0
    %270 = vmatprep.subr.mxu0 0.0
    %271 = vmatpush1.msra.mxu0 0.0
    %272 = vmatprep.subr.mxu0 0.0
    %273 = vmatpush1.msra.mxu0 0.0
    %274 = vmatprep.subr.mxu0 0.0
    %275 = vmatpush1.msra.mxu0 0.0
    %276 = vmatprep.subr.mxu0 0.0
    %277 = vmatpush1.msra.mxu0 0.0
    %278 = vmatprep.subr.mxu0 0.0
    %279 = vmatpush1.msra.mxu0 0.0
    %280 = vmatprep.subr.mxu0 0.0
    %281 = vmatpush1.msra.mxu0 0.0
    %282 = vmatprep.subr.mxu0 0.0
    %283 = vmatpush1.msra.mxu0 0.0
    %284 = vmatprep.subr.mxu0 0.0
    %285 = vmatpush1.msra.mxu0 0.0
    %286 = vmatprep.subr.mxu0 0.0
    %287 = vmatpush1.msra.mxu0 0.0
    %288 = vmatprep.subr.mxu0 0.0
    %289 = vmatpush1.msra.mxu0 0.0
    %290 = vmatprep.mubr.f32.mxu0 0.0
    %291 = vmatmul.mubr.f32.gmra.mrb[0].mxu0 %v224
    %v292 = vpop.f32.mrb[0].mxu0
    %v293 = vadd.f32 %v222, %v292
    %v294 = vpop.f32.mrb[0].mxu0
    %295 = vdwg.mxu0
    %vm296 = vcmask 15360
    %297 = vst.msk [vmem:[%s3] sm:$0xff] %vm296, %v293
    %299 = vrot.lane.b32.xlu0 %v293, 126
    %v300 = vpop.permute.xlu0 %299
    %s302 = scalar_lea.vmem %s3, 8
    %303 = vst.msk [vmem:[%s302] sm:$0xff] %vm296, %v300
    %304 = vrot.lane.b32.xlu0 %v293, 124
    %v305 = vpop.permute.xlu0 %304
    %s307 = scalar_lea.vmem %s3, 16
    %308 = vst.msk [vmem:[%s307] sm:$0xff] %vm296, %v305
    // Predicated region
    $region18: #{tpu_custom_call.1} parent=1 // pred_check
      _
    $region19: #{tpu_custom_call.1} parent=1 // pred_check_branch
      %310 = sbr.rel (0) target = $region21
    $region20: #{tpu_custom_call.1} parent=1 // pred_region
      _
    $region21: #{tpu_custom_call.1} parent=1 // pred_fallthru
      _
    // Predicated region
    $region22: #{tpu_custom_call.1} parent=1 // pred_check
      _
    $region23: #{tpu_custom_call.1} parent=1 // pred_check_branch
      %312 = sbr.rel (0) target = $region25
    $region24: #{tpu_custom_call.1} parent=1 // pred_region
      _
    $region25: #{tpu_custom_call.1} parent=1 // pred_fallthru
      _
    %313 = vsyncpa [#allocation3], 1

</llo_original>
